<compile_context>
chip_gen: v7x
topology: tpu7x:2x2x1
jax: 0.10.0
libtpu: 0.0.40
codegen_flags: <defaults>
</compile_context>

<pallas_src>
import jax
import jax.numpy as jnp
from jax.experimental import pallas as pl
from jax.experimental.pallas import tpu as pltpu

LEAKY_SLOPE = 0.01  # nn.LeakyReLU default negative_slope
BN_EPS = 1e-5


# ---------------------------------------------------------------------------
# Kernel: 3 matmuls (bf16 operands, f32 accumulate) + bias + LeakyReLU.
# ---------------------------------------------------------------------------
def comp_kernel(x_ref,
                w1_ref, b1_ref,
                w2_ref, b2_ref,
                wl_ref, bl_ref,
                o_ref):
    x = x_ref[...].astype(jnp.bfloat16)  # no-op if the caller already passes bf16

    # hidden layer 1 (initial BN + Linear + BN folded into w1/b1) -> LeakyReLU
    h = jnp.dot(x, w1_ref[...], preferred_element_type=jnp.float32) + b1_ref[...]
    h = jnp.maximum(h, LEAKY_SLOPE * h)

    # hidden layer 2 (Linear + BN folded into w2/b2) -> LeakyReLU
    h = jnp.dot(h.astype(jnp.bfloat16), w2_ref[...],
                preferred_element_type=jnp.float32) + b2_ref[...]
    h = jnp.maximum(h, LEAKY_SLOPE * h)

    # fused (MLP output linear) @ (activate_out linear)
    o = jnp.dot(h.astype(jnp.bfloat16), wl_ref[...],
                preferred_element_type=jnp.float32) + bl_ref[...]
    o_ref[...] = o.astype(o_ref.dtype)


# ---------------------------------------------------------------------------
# Generation-aware batch-tile selection.
# ---------------------------------------------------------------------------
def _num_tensorcores():
    """2 TensorCores/chip on v7x, 1 on v5e/v6e (and anything unknown)."""
    try:
        kind = jax.devices()[0].device_kind.lower()
    except Exception:
        return 1
    return 2 if "v7" in kind else 1


def _pick_bm(B):
    n_tc = _num_tensorcores()
    if n_tc <= 1 or B % (8 * n_tc) != 0:
        return B                       # grid=(1,): no per-step pipeline overhead
    return B // n_tc                   # one fat tile per TensorCore


def comp_model_forward(x, kp, *, bm=None, out_dtype=jnp.float32):
    """x: (B, dim) float32 or bfloat16.  kp: folded kernel params (fold_params)."""
    B, dim = x.shape
    H = kp["w1"].shape[1]
    E = kp["wl"].shape[1]
    if bm is None:
        bm = _pick_bm(B)
    bm = min(bm, B)
    assert B % bm == 0, "batch must be a multiple of the batch tile"
    grid_m = B // bm

    full = lambda shape: pl.BlockSpec(shape, lambda i: (0, 0))
    in_specs = [
        pl.BlockSpec((bm, dim), lambda i: (i, 0)),   # x tile
        full((dim, H)), full((1, H)),                # layer 1 (folded)
        full((H, H)),   full((1, H)),                # layer 2 (folded)
        full((H, E)),   full((1, E)),                # fused output linear
    ]

    # Advisory cost for XLA's scheduler (kernel is launch/DMA-overhead bound).
    x_bytes = x.size * x.dtype.itemsize
    w_bytes = (kp["w1"].size + kp["w2"].size + kp["wl"].size) * 2          # bf16
    b_bytes = (kp["b1"].size + kp["b2"].size + kp["bl"].size) * 4          # f32
    o_bytes = B * E * jnp.dtype(out_dtype).itemsize
    cost = pl.CostEstimate(
        flops=2 * B * (dim * H + H * H + H * E),
        transcendentals=0,
        bytes_accessed=x_bytes + w_bytes + b_bytes + o_bytes,
    )

    return pl.pallas_call(
        comp_kernel,
        out_shape=jax.ShapeDtypeStruct((B, E), out_dtype),
        grid=(grid_m,),
        in_specs=in_specs,
        out_specs=pl.BlockSpec((bm, E), lambda i: (i, 0)),
        compiler_params=pltpu.CompilerParams(dimension_semantics=("parallel",)),
        cost_estimate=cost,
    )(x, kp["w1"], kp["b1"], kp["w2"], kp["b2"], kp["wl"], kp["bl"])


# ---------------------------------------------------------------------------
# Host-side parameter construction (raw module params) and folding.
# ---------------------------------------------------------------------------
def fold_bn(gamma, beta, mean, var, eps=BN_EPS):
    s = gamma / jnp.sqrt(var + eps)
    b = beta - mean * s
    return s, b


def build_raw_params(key, dim, H, E):
    """Deterministic synthetic module parameters. Linear weights stored as
    (in, out) so y = x @ W + b (i.e. transposed vs. PyTorch storage)."""
    ks = jax.random.split(key, 20)
    u = lambda k, shape, lo=-0.05, hi=0.05: jax.random.uniform(
        k, shape, jnp.float32, lo, hi)

    def bn(kg, kb, km, kv, n):
        gamma = 1.0 + u(kg, (n,))
        beta = u(kb, (n,))
        mean = u(km, (n,))
        var = 1.0 + jax.random.uniform(kv, (n,), jnp.float32, 0.0, 0.1)
        return gamma, beta, mean, var

    raw = {}
    # initial BatchNorm1d(dim)
    raw["bn0"] = bn(ks[0], ks[1], ks[2], ks[3], dim)
    # hidden layer 1: Linear(dim, H) + BN(H)
    raw["w1"], raw["lb1"] = u(ks[4], (dim, H)), u(ks[5], (H,))
    raw["bn1"] = bn(ks[6], ks[7], ks[8], ks[9], H)
    # hidden layer 2: Linear(H, H) + BN(H)
    raw["w2"], raw["lb2"] = u(ks[10], (H, H)), u(ks[11], (H,))
    raw["bn2"] = bn(ks[12], ks[13], ks[14], ks[15], H)
    # MLP output layer: Linear(H, comp_hidden=H)
    raw["wo"], raw["bo"] = u(ks[16], (H, H)), u(ks[17], (H,))
    # activate_out: Linear(comp_hidden, embed_dim)
    raw["wp"], raw["bp"] = u(ks[18], (H, E)), u(ks[19], (E,))
    return raw


def fold_params(raw):
    """Fold BN (eval mode) into weights/biases, fuse the last two linears, and
    materialize weights as bf16 / biases as (1,N) f32 exactly once."""
    in_s, in_b = fold_bn(*raw["bn0"])
    s1, sh1 = fold_bn(*raw["bn1"])
    s2, sh2 = fold_bn(*raw["bn2"])

    # layer 1: ((x*in_s + in_b) @ w1 + lb1) * s1 + sh1
    w1s = raw["w1"] * s1[None, :]
    w1f = in_s[:, None] * w1s
    b1f = in_b @ w1s + raw["lb1"] * s1 + sh1

    # layer 2: (h @ w2 + lb2) * s2 + sh2
    w2f = raw["w2"] * s2[None, :]
    b2f = raw["lb2"] * s2 + sh2

    # fused output: (h @ wo + bo) @ wp + bp
    wlf = raw["wo"] @ raw["wp"]
    blf = raw["bo"] @ raw["wp"] + raw["bp"]

    row = lambda v: v.reshape(1, -1).astype(jnp.float32)
    return dict(
        w1=w1f.astype(jnp.bfloat16), b1=row(b1f),
        w2=w2f.astype(jnp.bfloat16), b2=row(b2f),
        wl=wlf.astype(jnp.bfloat16), bl=row(blf),
    )


def reference_forward(x, raw):
    """Pure-JAX f32 reference following the original (unfolded) module math."""
    leaky = lambda h: jnp.where(h > 0, h, LEAKY_SLOPE * h)
    s0, b0 = fold_bn(*raw["bn0"])
    s1, sh1 = fold_bn(*raw["bn1"])
    s2, sh2 = fold_bn(*raw["bn2"])
    h = x * s0 + b0
    h = leaky((h @ raw["w1"] + raw["lb1"]) * s1 + sh1)
    h = leaky((h @ raw["w2"] + raw["lb2"]) * s2 + sh2)
    h = h @ raw["wo"] + raw["bo"]
    return h @ raw["wp"] + raw["bp"]


if __name__ == "__main__":
    # synthetic CompModel hyper-params:
    #   feat_root='ecapa' -> 256, context=0 -> dim = 256
    #   comp_hidden=128, comp_layers=2, embed_dim=128, no_initial_bn=False
    DIM, H, E = 256, 128, 128
    B = 256   # v5e/v6e -> one 256-row tile (grid=1); v7x -> two 128-row parallel tiles

    key = jax.random.PRNGKey(0)
    kx, kp_key = jax.random.split(key)
    x = jax.random.normal(kx, (B, DIM), jnp.float32)

    raw = build_raw_params(kp_key, DIM, H, E)
    kparams = fold_params(raw)

    out = comp_model_forward(x, kparams)
    out = jax.block_until_ready(out)

    ref = reference_forward(x, raw)
    assert out.shape == (B, E)
    max_err = float(jnp.max(jnp.abs(out - ref)))
    # bf16 matmul operands (f32 accumulate) -> loosened tolerance vs pure-f32 ref
    assert max_err < 5e-2, f"mismatch vs reference (max abs err {max_err})"
    print("KERNEL_OK")
</pallas_src>

<mosaic_0001>
module attributes {stable_mosaic.version = 11 : i64} {
  func.func @comp_kernel(%arg0: i32, %arg1: memref<256x256xf32, #tpu.memory_space<vmem>>, %arg2: memref<256x128xbf16, #tpu.memory_space<vmem>>, %arg3: memref<1x128xf32, #tpu.memory_space<vmem>>, %arg4: memref<128x128xbf16, #tpu.memory_space<vmem>>, %arg5: memref<1x128xf32, #tpu.memory_space<vmem>>, %arg6: memref<128x128xbf16, #tpu.memory_space<vmem>>, %arg7: memref<1x128xf32, #tpu.memory_space<vmem>>, %arg8: memref<256x128xf32, #tpu.memory_space<vmem>>) attributes {dimension_semantics = [#tpu.dimension_semantics<parallel>], iteration_bounds = array<i64: 1>, scalar_prefetch = 0 : i64, scratch_operands = 0 : i64, tpu.core_type = #tpu.core_type<tc>, window_params = [{transform_indices = @transform_0, window_bounds = array<i64: 256, 256>}, {pipeline_mode = #tpu.pipeline_mode<synchronous>, transform_indices = @transform_1, window_bounds = array<i64: 256, 128>}, {pipeline_mode = #tpu.pipeline_mode<synchronous>, transform_indices = @transform_2, window_bounds = array<i64: 1, 128>}, {pipeline_mode = #tpu.pipeline_mode<synchronous>, transform_indices = @transform_3, window_bounds = array<i64: 128, 128>}, {pipeline_mode = #tpu.pipeline_mode<synchronous>, transform_indices = @transform_4, window_bounds = array<i64: 1, 128>}, {pipeline_mode = #tpu.pipeline_mode<synchronous>, transform_indices = @transform_5, window_bounds = array<i64: 128, 128>}, {pipeline_mode = #tpu.pipeline_mode<synchronous>, transform_indices = @transform_6, window_bounds = array<i64: 1, 128>}, {transform_indices = @transform_7, window_bounds = array<i64: 256, 128>}]} {
    %c0 = arith.constant 0 : index
    %c0_0 = arith.constant 0 : index
    %0 = vector.load %arg1[%c0, %c0_0] : memref<256x256xf32, #tpu.memory_space<vmem>>, vector<256x256xf32>
    %1 = arith.truncf %0 : vector<256x256xf32> to vector<256x256xbf16>
    %c0_1 = arith.constant 0 : index
    %c0_2 = arith.constant 0 : index
    %2 = vector.load %arg2[%c0_1, %c0_2] : memref<256x128xbf16, #tpu.memory_space<vmem>>, vector<256x128xbf16>
    %cst = arith.constant dense<0.000000e+00> : vector<256x128xf32>
    %3 = tpu.matmul %1, %2, %cst {dimension_numbers = #tpu.dot_dimension_numbers<[1], [0], [0], [1], [0, 0, 1, 1], [], []>} : vector<256x256xbf16>, vector<256x128xbf16>, vector<256x128xf32> -> vector<256x128xf32>
    %c0_3 = arith.constant 0 : index
    %c0_4 = arith.constant 0 : index
    %4 = vector.load %arg3[%c0_3, %c0_4] : memref<1x128xf32, #tpu.memory_space<vmem>>, vector<1x128xf32>
    %5 = vector.broadcast %4 : vector<1x128xf32> to vector<256x128xf32>
    %6 = arith.addf %3, %5 : vector<256x128xf32>
    %cst_5 = arith.constant 0.00999999977 : f32
    %7 = vector.broadcast %cst_5 : f32 to vector<256x128xf32>
    %8 = arith.mulf %7, %6 : vector<256x128xf32>
    %9 = arith.maximumf %6, %8 : vector<256x128xf32>
    %10 = arith.truncf %9 : vector<256x128xf32> to vector<256x128xbf16>
    %c0_6 = arith.constant 0 : index
    %c0_7 = arith.constant 0 : index
    %11 = vector.load %arg4[%c0_6, %c0_7] : memref<128x128xbf16, #tpu.memory_space<vmem>>, vector<128x128xbf16>
    %cst_8 = arith.constant dense<0.000000e+00> : vector<256x128xf32>
    %12 = tpu.matmul %10, %11, %cst_8 {dimension_numbers = #tpu.dot_dimension_numbers<[1], [0], [0], [1], [0, 0, 1, 1], [], []>} : vector<256x128xbf16>, vector<128x128xbf16>, vector<256x128xf32> -> vector<256x128xf32>
    %c0_9 = arith.constant 0 : index
    %c0_10 = arith.constant 0 : index
    %13 = vector.load %arg5[%c0_9, %c0_10] : memref<1x128xf32, #tpu.memory_space<vmem>>, vector<1x128xf32>
    %14 = vector.broadcast %13 : vector<1x128xf32> to vector<256x128xf32>
    %15 = arith.addf %12, %14 : vector<256x128xf32>
    %cst_11 = arith.constant 0.00999999977 : f32
    %16 = vector.broadcast %cst_11 : f32 to vector<256x128xf32>
    %17 = arith.mulf %16, %15 : vector<256x128xf32>
    %18 = arith.maximumf %15, %17 : vector<256x128xf32>
    %19 = arith.truncf %18 : vector<256x128xf32> to vector<256x128xbf16>
    %c0_12 = arith.constant 0 : index
    %c0_13 = arith.constant 0 : index
    %20 = vector.load %arg6[%c0_12, %c0_13] : memref<128x128xbf16, #tpu.memory_space<vmem>>, vector<128x128xbf16>
    %cst_14 = arith.constant dense<0.000000e+00> : vector<256x128xf32>
    %21 = tpu.matmul %19, %20, %cst_14 {dimension_numbers = #tpu.dot_dimension_numbers<[1], [0], [0], [1], [0, 0, 1, 1], [], []>} : vector<256x128xbf16>, vector<128x128xbf16>, vector<256x128xf32> -> vector<256x128xf32>
    %c0_15 = arith.constant 0 : index
    %c0_16 = arith.constant 0 : index
    %22 = vector.load %arg7[%c0_15, %c0_16] : memref<1x128xf32, #tpu.memory_space<vmem>>, vector<1x128xf32>
    %23 = vector.broadcast %22 : vector<1x128xf32> to vector<256x128xf32>
    %24 = arith.addf %21, %23 : vector<256x128xf32>
    %c0_17 = arith.constant 0 : index
    %c0_18 = arith.constant 0 : index
    %25 = vector.load %arg8[%c0_17, %c0_18] : memref<256x128xf32, #tpu.memory_space<vmem>>, vector<256x128xf32>
    tpu.vector_store %arg8[%c0_17, %c0_18], %24 {strides = array<i32>} : memref<256x128xf32, #tpu.memory_space<vmem>>, vector<256x128xf32>,
    return
  }
  func.func @transform_0(%arg0: i32) -> (i32, i32) {
    %c0_i32 = arith.constant 0 : i32
    %c0_i32_0 = arith.constant 0 : i32
    return %arg0, %c0_i32 : i32, i32
  }
  func.func @transform_1(%arg0: i32) -> (i32, i32) {
    %c0_i32 = arith.constant 0 : i32
    %c0_i32_0 = arith.constant 0 : i32
    %c0_i32_1 = arith.constant 0 : i32
    return %c0_i32, %c0_i32_0 : i32, i32
  }
  func.func @transform_2(%arg0: i32) -> (i32, i32) {
    %c0_i32 = arith.constant 0 : i32
    %c0_i32_0 = arith.constant 0 : i32
    %c0_i32_1 = arith.constant 0 : i32
    return %c0_i32, %c0_i32_0 : i32, i32
  }
  func.func @transform_3(%arg0: i32) -> (i32, i32) {
    %c0_i32 = arith.constant 0 : i32
    %c0_i32_0 = arith.constant 0 : i32
    %c0_i32_1 = arith.constant 0 : i32
    return %c0_i32, %c0_i32_0 : i32, i32
  }
  func.func @transform_4(%arg0: i32) -> (i32, i32) {
    %c0_i32 = arith.constant 0 : i32
    %c0_i32_0 = arith.constant 0 : i32
    %c0_i32_1 = arith.constant 0 : i32
    return %c0_i32, %c0_i32_0 : i32, i32
  }
  func.func @transform_5(%arg0: i32) -> (i32, i32) {
    %c0_i32 = arith.constant 0 : i32
    %c0_i32_0 = arith.constant 0 : i32
    %c0_i32_1 = arith.constant 0 : i32
    return %c0_i32, %c0_i32_0 : i32, i32
  }
  func.func @transform_6(%arg0: i32) -> (i32, i32) {
    %c0_i32 = arith.constant 0 : i32
    %c0_i32_0 = arith.constant 0 : i32
    %c0_i32_1 = arith.constant 0 : i32
    return %c0_i32, %c0_i32_0 : i32, i32
  }
  func.func @transform_7(%arg0: i32) -> (i32, i32) {
    %c0_i32 = arith.constant 0 : i32
    %c0_i32_0 = arith.constant 0 : i32
    return %arg0, %c0_i32 : i32, i32
  }
}

</mosaic_0001>

<llo_original>
// kernel: tpu_custom_call.1
$region0: #{tpu_custom_call.1}
  #allocation0 [shape = 'u32[]', space=smem, size = 0x4, offset = 0x4, fixed_abs, tag = 'smem constant byte address 0x4 - core index']
  #allocation1 [shape = 'u32[144,128]{1,0:T(1,128)}', space=vmem, size = 0x12000, scoped, tag = 'internal scratch']
  %s0 = inlined_call_operand.hbm [shape: f32[256,256], index: 0, kind: input, shape index: {}]
  %s1 = inlined_call_operand.hbm [shape: bf16[256,128], index: 1, kind: input, shape index: {}]
  %s2 = inlined_call_operand.vmem [shape: f32[1,128], index: 2, kind: input, shape index: {}]
  %s3 = inlined_call_operand.hbm [shape: bf16[128,128], index: 3, kind: input, shape index: {}]
  %s4 = inlined_call_operand.vmem [shape: f32[1,128], index: 4, kind: input, shape index: {}]
  %s5 = inlined_call_operand.hbm [shape: bf16[128,128], index: 5, kind: input, shape index: {}]
  %s6 = inlined_call_operand.vmem [shape: f32[1,128], index: 6, kind: input, shape index: {}]
  %s7 = inlined_call_operand.hbm [shape: f32[256,128], index: 7, kind: output, shape index: {}]
  %s8 = sld [smem:[#allocation0]]
  $region54: #{tpu_custom_call.1} parent=0
    _
  %s10 = ssub.s32 1, %s8
  %s11 = scalar_select 0, %s10, %s8
  $region1: #{tpu_custom_call.1} parent=0
    #allocation2 [shape = 'u8[262144]{0}', space=vmem, size = 0x40000, scoped, tag = 'input window, operand 0, single buffered']
    #allocation3 [shape = 's32[1]{0}', space=sflag, size = 0x4, scoped, tag = 'scoped memory for tpu_custom_call.1']
    #allocation4 [shape = 's32[1]{0}', space=sflag, size = 0x4, scoped, tag = 'scoped memory for tpu_custom_call.1']
    #allocation5 [shape = 'u8[65536]{0}', space=vmem, size = 0x10000, scoped, tag = 'input window, operand 1, single buffered']
    #allocation6 [shape = 's32[1]{0}', space=sflag, size = 0x4, scoped, tag = 'scoped memory for tpu_custom_call.1']
    #allocation7 [shape = 'u8[32768]{0}', space=vmem, size = 0x8000, scoped, tag = 'input window, operand 3, single buffered']
    #allocation8 [shape = 'u8[32768]{0}', space=vmem, size = 0x8000, scoped, tag = 'input window, operand 5, single buffered']
    #allocation9 [shape = 's32[1]{0}', space=sflag, size = 0x4, scoped, tag = 'scoped memory for tpu_custom_call.1']
    #allocation10 [shape = 'u8[131072]{0}', space=vmem, size = 0x20000, scoped, tag = 'output window, operand 0, single buffered']
    %12 = vsyncpa [#allocation3], 0
    %13 = vsyncpa [#allocation6], 0
    %14 = vsyncpa [#allocation9], 0
    %15 = vsyncpa [#allocation4], 0
    // Predicated region
    $region2: #{tpu_custom_call.1} parent=1 // pred_check
      _
    $region3: #{tpu_custom_call.1} parent=1 // pred_check_branch
      %17 = sbr.rel (0) target = $region5
    $region4: #{tpu_custom_call.1} parent=1 // pred_region
      %s19 = ssub.s32 8192, 8192
      %20 = vsyncadd [#allocation3], %s19
      %s21 = sshll.u32 [#allocation2], 4
      %s22 = int_to_ptr.vmem [resolvable:$true] %s21
      %27 = dma.hbm_to_vmem [thread:$0]  %s0, 8192, %s22, [#allocation3], 256, 256, 16
    $region5: #{tpu_custom_call.1} parent=1 // pred_fallthru
      _
    // Predicated region
    $region6: #{tpu_custom_call.1} parent=1 // pred_check
      _
    $region7: #{tpu_custom_call.1} parent=1 // pred_check_branch
      %29 = sbr.rel (0) target = $region9
    $region8: #{tpu_custom_call.1} parent=1 // pred_region
      %s31 = ssub.s32 2048, 2048
      %32 = vsyncadd [#allocation6], %s31
      %s33 = sshll.u32 [#allocation5], 4
      %s34 = int_to_ptr.vmem [resolvable:$true] %s33
      %39 = dma.hbm_to_vmem [thread:$0]  %s1, 2048, %s34, [#allocation6], 64, 64, 4
    $region9: #{tpu_custom_call.1} parent=1 // pred_fallthru
      _
    // Predicated region
    $region10: #{tpu_custom_call.1} parent=1 // pred_check
      _
    $region11: #{tpu_custom_call.1} parent=1 // pred_check_branch
      %41 = sbr.rel (0) target = $region13
    $region12: #{tpu_custom_call.1} parent=1 // pred_region
      _
    $region13: #{tpu_custom_call.1} parent=1 // pred_fallthru
      _
    // Predicated region
    $region14: #{tpu_custom_call.1} parent=1 // pred_check
      _
    $region15: #{tpu_custom_call.1} parent=1 // pred_check_branch
      %43 = sbr.rel (0) target = $region17
    $region16: #{tpu_custom_call.1} parent=1 // pred_region
      %s45 = ssub.s32 1024, 1024
      %46 = vsyncadd [#allocation6], %s45
      %s47 = sshll.u32 [#allocation7], 4
      %s48 = int_to_ptr.vmem [resolvable:$true] %s47
      %53 = dma.hbm_to_vmem [thread:$0]  %s3, 1024, %s48, [#allocation6], 64, 64, 4
    $region17: #{tpu_custom_call.1} parent=1 // pred_fallthru
      _
    // Predicated region
    $region18: #{tpu_custom_call.1} parent=1 // pred_check
      _
    $region19: #{tpu_custom_call.1} parent=1 // pred_check_branch
      %55 = sbr.rel (0) target = $region21
    $region20: #{tpu_custom_call.1} parent=1 // pred_region
      _
    $region21: #{tpu_custom_call.1} parent=1 // pred_fallthru
      _
    // Predicated region
    $region22: #{tpu_custom_call.1} parent=1 // pred_check
      _
    $region23: #{tpu_custom_call.1} parent=1 // pred_check_branch
      %57 = sbr.rel (0) target = $region25
    $region24: #{tpu_custom_call.1} parent=1 // pred_region
      %s59 = ssub.s32 1024, 1024
      %60 = vsyncadd [#allocation9], %s59
      %s61 = sshll.u32 [#allocation8], 4
      %s62 = int_to_ptr.vmem [resolvable:$true] %s61
      %67 = dma.hbm_to_vmem [thread:$0]  %s5, 1024, %s62, [#allocation9], 64, 64, 4
    $region25: #{tpu_custom_call.1} parent=1 // pred_fallthru
      _
    // Predicated region
    $region26: #{tpu_custom_call.1} parent=1 // pred_check
      _
    $region27: #{tpu_custom_call.1} parent=1 // pred_check_branch
      %69 = sbr.rel (0) target = $region29
    $region28: #{tpu_custom_call.1} parent=1 // pred_region
      _
    $region29: #{tpu_custom_call.1} parent=1 // pred_fallthru
      _
    // Predicated region
    $region30: #{tpu_custom_call.1} parent=1 // pred_check
      _
    $region31: #{tpu_custom_call.1} parent=1 // pred_check_branch
      %71 = sbr.rel (0) target = $region33
    $region32: #{tpu_custom_call.1} parent=1 // pred_region
      %72 = dma.done [#allocation3], 8192
    $region33: #{tpu_custom_call.1} parent=1 // pred_fallthru
      _
    // Predicated region
    $region34: #{tpu_custom_call.1} parent=1 // pred_check
      _
    $region35: #{tpu_custom_call.1} parent=1 // pred_check_branch
      %74 = sbr.rel (0) target = $region37
    $region36: #{tpu_custom_call.1} parent=1 // pred_region
      %75 = dma.done [#allocation6], 2048
    $region37: #{tpu_custom_call.1} parent=1 // pred_fallthru
      _
    // Predicated region
    $region38: #{tpu_custom_call.1} parent=1 // pred_check
      _
    $region39: #{tpu_custom_call.1} parent=1 // pred_check_branch
      %77 = sbr.rel (0) target = $region41
    $region40: #{tpu_custom_call.1} parent=1 // pred_region
      %78 = dma.done [#allocation6], 1024
    $region41: #{tpu_custom_call.1} parent=1 // pred_fallthru
      _
    // Predicated region
    $region42: #{tpu_custom_call.1} parent=1 // pred_check
      _
    $region43: #{tpu_custom_call.1} parent=1 // pred_check_branch
      %80 = sbr.rel (0) target = $region45
    $region44: #{tpu_custom_call.1} parent=1 // pred_region
      %81 = dma.done [#allocation9], 1024
    $region45: #{tpu_custom_call.1} parent=1 // pred_fallthru
      _
    %v83 = vld [vmem:[#allocation2] sm:$0xff]
    %v84 = vld [vmem:[#allocation2 + $0x8] sm:$0xff]
    %v85 = vld [vmem:[#allocation2 + $0x10] sm:$0xff]
    %v86 = vld [vmem:[#allocation2 + $0x18] sm:$0xff]
    %v87 = vld [vmem:[#allocation2 + $0x20] sm:$0xff]
    %v88 = vld [vmem:[#allocation2 + $0x28] sm:$0xff]
    %v89 = vld [vmem:[#allocation2 + $0x30] sm:$0xff]
    %v90 = vld [vmem:[#allocation2 + $0x38] sm:$0xff]
    %v91 = vld [vmem:[#allocation2 + $0x40] sm:$0xff]
    %v92 = vld [vmem:[#allocation2 + $0x48] sm:$0xff]
    %v93 = vld [vmem:[#allocation2 + $0x50] sm:$0xff]
    %v94 = vld [vmem:[#allocation2 + $0x58] sm:$0xff]
    %v95 = vld [vmem:[#allocation2 + $0x60] sm:$0xff]
    %v96 = vld [vmem:[#allocation2 + $0x68] sm:$0xff]
    %v97 = vld [vmem:[#allocation2 + $0x70] sm:$0xff]
    %v98 = vld [vmem:[#allocation2 + $0x78] sm:$0xff]
    %v99 = vld [vmem:[#allocation2 + $0x80] sm:$0xff]
    %v100 = vld [vmem:[#allocation2 + $0x88] sm:$0xff]
    %v101 = vld [vmem:[#allocation2 + $0x90] sm:$0xff]
    %v102 = vld [vmem:[#allocation2 + $0x98] sm:$0xff]
    %v103 = vld [vmem:[#allocation2 + $0xa0] sm:$0xff]
    %v104 = vld [vmem:[#allocation2 + $0xa8] sm:$0xff]
    %v105 = vld [vmem:[#allocation2 + $0xb0] sm:$0xff]
    %v106 = vld [vmem:[#allocation2 + $0xb8] sm:$0xff]
    %v107 = vld [vmem:[#allocation2 + $0xc0] sm:$0xff]
    %v108 = vld [vmem:[#allocation2 + $0xc8] sm:$0xff]
    %v109 = vld [vmem:[#allocation2 + $0xd0] sm:$0xff]
    %v110 = vld [vmem:[#allocation2 + $0xd8] sm:$0xff]
    %v111 = vld [vmem:[#allocation2 + $0xe0] sm:$0xff]
    %v112 = vld [vmem:[#allocation2 + $0xe8] sm:$0xff]
    %v113 = vld [vmem:[#allocation2 + $0xf0] sm:$0xff]
    %v114 = vld [vmem:[#allocation2 + $0xf8] sm:$0xff]
    %v115 = vld [vmem:[#allocation2 + $0x100] sm:$0xff]
    %v116 = vld [vmem:[#allocation2 + $0x108] sm:$0xff]
    %v117 = vld [vmem:[#allocation2 + $0x110] sm:$0xff]
    %v118 = vld [vmem:[#allocation2 + $0x118] sm:$0xff]
    %v119 = vld [vmem:[#allocation2 + $0x120] sm:$0xff]
    %v120 = vld [vmem:[#allocation2 + $0x128] sm:$0xff]
    %v121 = vld [vmem:[#allocation2 + $0x130] sm:$0xff]
    %v122 = vld [vmem:[#allocation2 + $0x138] sm:$0xff]
    %v123 = vld [vmem:[#allocation2 + $0x140] sm:$0xff]
    %v124 = vld [vmem:[#allocation2 + $0x148] sm:$0xff]
    %v125 = vld [vmem:[#allocation2 + $0x150] sm:$0xff]
    %v126 = vld [vmem:[#allocation2 + $0x158] sm:$0xff]
    %v127 = vld [vmem:[#allocation2 + $0x160] sm:$0xff]
    %v128 = vld [vmem:[#allocation2 + $0x168] sm:$0xff]
    %v129 = vld [vmem:[#allocation2 + $0x170] sm:$0xff]
    %v130 = vld [vmem:[#allocation2 + $0x178] sm:$0xff]
    %v131 = vld [vmem:[#allocation2 + $0x180] sm:$0xff]
    %v132 = vld [vmem:[#allocation2 + $0x188] sm:$0xff]
    %v133 = vld [vmem:[#allocation2 + $0x190] sm:$0xff]
    %v134 = vld [vmem:[#allocation2 + $0x198] sm:$0xff]
    %v135 = vld [vmem:[#allocation2 + $0x1a0] sm:$0xff]
    %v136 = vld [vmem:[#allocation2 + $0x1a8] sm:$0xff]
    %v137 = vld [vmem:[#allocation2 + $0x1b0] sm:$0xff]
    %v138 = vld [vmem:[#allocation2 + $0x1b8] sm:$0xff]
    %v139 = vld [vmem:[#allocation2 + $0x1c0] sm:$0xff]
    %v140 = vld [vmem:[#allocation2 + $0x1c8] sm:$0xff]
    %v141 = vld [vmem:[#allocation2 + $0x1d0] sm:$0xff]
    %v142 = vld [vmem:[#allocation2 + $0x1d8] sm:$0xff]
    %v143 = vld [vmem:[#allocation2 + $0x1e0] sm:$0xff]
    %v144 = vld [vmem:[#allocation2 + $0x1e8] sm:$0xff]
    %v145 = vld [vmem:[#allocation2 + $0x1f0] sm:$0xff]
    %v146 = vld [vmem:[#allocation2 + $0x1f8] sm:$0xff]
    %v147 = vpack.c.bf16 %v85, %v83
    %v148 = vpack.c.bf16 %v86, %v84
    %v149 = vpack.c.bf16 %v89, %v87
    %v150 = vpack.c.bf16 %v90, %v88
    %v151 = vpack.c.bf16 %v93, %v91
    %v152 = vpack.c.bf16 %v94, %v92
    %v153 = vpack.c.bf16 %v97, %v95
    %v154 = vpack.c.bf16 %v98, %v96
    %v155 = vpack.c.bf16 %v101, %v99
    %v156 = vpack.c.bf16 %v102, %v100
    %v157 = vpack.c.bf16 %v105, %v103
    %v158 = vpack.c.bf16 %v106, %v104
    %v159 = vpack.c.bf16 %v109, %v107
    %v160 = vpack.c.bf16 %v110, %v108
    %v161 = vpack.c.bf16 %v113, %v111
    %v162 = vpack.c.bf16 %v114, %v112
    %v163 = vpack.c.bf16 %v117, %v115
    %v164 = vpack.c.bf16 %v118, %v116
    %v165 = vpack.c.bf16 %v121, %v119
    %v166 = vpack.c.bf16 %v122, %v120
    %v167 = vpack.c.bf16 %v125, %v123
    %v168 = vpack.c.bf16 %v126, %v124
    %v169 = vpack.c.bf16 %v129, %v127
    %v170 = vpack.c.bf16 %v130, %v128
    %v171 = vpack.c.bf16 %v133, %v131
    %v172 = vpack.c.bf16 %v134, %v132
    %v173 = vpack.c.bf16 %v137, %v135
    %v174 = vpack.c.bf16 %v138, %v136
    %v175 = vpack.c.bf16 %v141, %v139
    %v176 = vpack.c.bf16 %v142, %v140
    %v177 = vpack.c.bf16 %v145, %v143
    %v178 = vpack.c.bf16 %v146, %v144
    %v179 = vld [vmem:[#allocation5] sm:$0xf]
    %v180 = vld [vmem:[#allocation5 + $0x4] sm:$0xf]
    %v181 = vld [vmem:[#allocation5 + $0x8] sm:$0xf]
    %v182 = vld [vmem:[#allocation5 + $0xc] sm:$0xf]
    %v183 = vld [vmem:[#allocation5 + $0x10] sm:$0xf]
    %v184 = vld [vmem:[#allocation5 + $0x14] sm:$0xf]
    %v185 = vld [vmem:[#allocation5 + $0x18] sm:$0xf]
    %v186 = vld [vmem:[#allocation5 + $0x1c] sm:$0xf]
    %v187 = vld [vmem:[#allocation5 + $0x20] sm:$0xf]
    %v188 = vld [vmem:[#allocation5 + $0x24] sm:$0xf]
    %v189 = vld [vmem:[#allocation5 + $0x28] sm:$0xf]
    %v190 = vld [vmem:[#allocation5 + $0x2c] sm:$0xf]
    %v191 = vld [vmem:[#allocation5 + $0x30] sm:$0xf]
    %v192 = vld [vmem:[#allocation5 + $0x34] sm:$0xf]
    %v193 = vld [vmem:[#allocation5 + $0x38] sm:$0xf]
    %v194 = vld [vmem:[#allocation5 + $0x3c] sm:$0xf]
    %v195 = vld [vmem:[#allocation5 + $0x40] sm:$0xf]
    %v196 = vld [vmem:[#allocation5 + $0x44] sm:$0xf]
    %v197 = vld [vmem:[#allocation5 + $0x48] sm:$0xf]
    %v198 = vld [vmem:[#allocation5 + $0x4c] sm:$0xf]
    %v199 = vld [vmem:[#allocation5 + $0x50] sm:$0xf]
    %v200 = vld [vmem:[#allocation5 + $0x54] sm:$0xf]
    %v201 = vld [vmem:[#allocation5 + $0x58] sm:$0xf]
    %v202 = vld [vmem:[#allocation5 + $0x5c] sm:$0xf]
    %v203 = vld [vmem:[#allocation5 + $0x60] sm:$0xf]
    %v204 = vld [vmem:[#allocation5 + $0x64] sm:$0xf]
    %v205 = vld [vmem:[#allocation5 + $0x68] sm:$0xf]
    %v206 = vld [vmem:[#allocation5 + $0x6c] sm:$0xf]
    %v207 = vld [vmem:[#allocation5 + $0x70] sm:$0xf]
    %v208 = vld [vmem:[#allocation5 + $0x74] sm:$0xf]
    %v209 = vld [vmem:[#allocation5 + $0x78] sm:$0xf]
    %v210 = vld [vmem:[#allocation5 + $0x7c] sm:$0xf]
    %v211 = vld [vmem:[%s2] sm:$0x1]
    %v213 = vlaneseq
    %v214 = vshrl.u32 %v213, 7
    %v215 = vsub.s32 0, %v214
    %v216 = vrot.slane %v211, %v215
    %v250 = vunpack.c.l.b16 %v179
    %v251 = vunpack.c.l.b16 %v180
    %v252 = vunpack.c.l.b16 %v181
    %v253 = vunpack.c.l.b16 %v182
    %v254 = vunpack.c.l.b16 %v183
    %v255 = vunpack.c.l.b16 %v184
    %v256 = vunpack.c.l.b16 %v185
    %v257 = vunpack.c.l.b16 %v186
    %v258 = vunpack.c.l.b16 %v187
    %v259 = vunpack.c.l.b16 %v188
    %v260 = vunpack.c.l.b16 %v189
    %v261 = vunpack.c.l.b16 %v190
    %v262 = vunpack.c.l.b16 %v191
    %v263 = vunpack.c.l.b16 %v192
    %v264 = vunpack.c.l.b16 %v193
    %v265 = vunpack.c.l.b16 %v194
    %v266 = vunpack.c.l.b16 %v195
    %v267 = vunpack.c.l.b16 %v196
    %v268 = vunpack.c.l.b16 %v197
    %v269 = vunpack.c.l.b16 %v198
    %v270 = vunpack.c.l.b16 %v199
    %v271 = vunpack.c.l.b16 %v200
    %v272 = vunpack.c.l.b16 %v201
    %v273 = vunpack.c.l.b16 %v202
    %v274 = vunpack.c.l.b16 %v203
    %v275 = vunpack.c.l.b16 %v204
    %v276 = vunpack.c.l.b16 %v205
    %v277 = vunpack.c.l.b16 %v206
    %v278 = vunpack.c.l.b16 %v207
    %v279 = vunpack.c.l.b16 %v208
    %v280 = vunpack.c.l.b16 %v209
    %v281 = vunpack.c.l.b16 %v210
    %v282 = vpack.c.b16 %v251, %v250
    %v283 = vpack.c.b16 %v253, %v252
    %v284 = vpack.c.b16 %v255, %v254
    %v285 = vpack.c.b16 %v257, %v256
    %v286 = vpack.c.b16 %v259, %v258
    %v287 = vpack.c.b16 %v261, %v260
    %v288 = vpack.c.b16 %v263, %v262
    %v289 = vpack.c.b16 %v265, %v264
    %v290 = vpack.c.b16 %v267, %v266
    %v291 = vpack.c.b16 %v269, %v268
    %v292 = vpack.c.b16 %v271, %v270
    %v293 = vpack.c.b16 %v273, %v272
    %v294 = vpack.c.b16 %v275, %v274
    %v295 = vpack.c.b16 %v277, %v276
    %v296 = vpack.c.b16 %v279, %v278
    %v297 = vpack.c.b16 %v281, %v280
    %314 = vmatprep.subr.bf16.mxu0 0
    %315 = vmatpush1.bf16.msra.mxu0 %v282
    %316 = vmatprep.subr.bf16.mxu0 0
    %317 = vmatpush1.bf16.msra.mxu0 %v283
    %318 = vmatprep.subr.bf16.mxu0 0
    %319 = vmatpush1.bf16.msra.mxu0 %v284
    %320 = vmatprep.subr.bf16.mxu0 0
    %321 = vmatpush1.bf16.msra.mxu0 %v285
    %322 = vmatprep.subr.bf16.mxu0 0
    %323 = vmatpush1.bf16.msra.mxu0 %v286
    %324 = vmatprep.subr.bf16.mxu0 0
    %325 = vmatpush1.bf16.msra.mxu0 %v287
    %326 = vmatprep.subr.bf16.mxu0 0
    %327 = vmatpush1.bf16.msra.mxu0 %v288
    %328 = vmatprep.subr.bf16.mxu0 0
    %329 = vmatpush1.bf16.msra.mxu0 %v289
    %330 = vmatprep.subr.bf16.mxu0 0
    %331 = vmatpush1.bf16.msra.mxu0 %v290
    %332 = vmatprep.subr.bf16.mxu0 0
    %333 = vmatpush1.bf16.msra.mxu0 %v291
    %334 = vmatprep.subr.bf16.mxu0 0
    %335 = vmatpush1.bf16.msra.mxu0 %v292
    %336 = vmatprep.subr.bf16.mxu0 0
    %337 = vmatpush1.bf16.msra.mxu0 %v293
    %338 = vmatprep.subr.bf16.mxu0 0
    %339 = vmatpush1.bf16.msra.mxu0 %v294
    %340 = vmatprep.subr.bf16.mxu0 0
    %341 = vmatpush1.bf16.msra.mxu0 %v295
    %342 = vmatprep.subr.bf16.mxu0 0
    %343 = vmatpush1.bf16.msra.mxu0 %v296
    %344 = vmatprep.subr.bf16.mxu0 0
    %345 = vmatpush1.bf16.msra.mxu0 %v297
    %346 = vmatprep.mubr.bf16.mxu0 %v148
    %347 = vmatmul.mubr.bf16.gmra.mrb[0].mxu0 %v147
    %v348 = vpop.f32.mrb[0].mxu0
    %v349 = vadd.f32 %v216, %v348
    %v350 = vpop.f32.mrb[0].mxu0
    %v351 = vpop.f32.mrb[0].mxu0
    %v352 = vadd.f32 %v216, %v351
    %v353 = vpop.f32.mrb[0].mxu0
    %354 = vmatprep.mubr.bf16.mxu0 %v150
    %355 = vmatmul.mubr.bf16.gmra.mrb[0].mxu0 %v149
    %v356 = vpop.f32.mrb[0].mxu0
    %v357 = vadd.f32 %v216, %v356
    %v358 = vpop.f32.mrb[0].mxu0
    %v359 = vpop.f32.mrb[0].mxu0
    %v360 = vadd.f32 %v216, %v359
    %v361 = vpop.f32.mrb[0].mxu0
    %362 = vmatprep.mubr.bf16.mxu0 %v152
    %363 = vmatmul.mubr.bf16.gmra.mrb[0].mxu0 %v151
    %v364 = vpop.f32.mrb[0].mxu0
    %v365 = vadd.f32 %v216, %v364
    %v366 = vpop.f32.mrb[0].mxu0
    %v367 = vpop.f32.mrb[0].mxu0
    %v368 = vadd.f32 %v216, %v367
    %v369 = vpop.f32.mrb[0].mxu0
    %370 = vmatprep.mubr.bf16.mxu0 %v154
    %371 = vmatmul.mubr.bf16.gmra.mrb[0].mxu0 %v153
    %v372 = vpop.f32.mrb[0].mxu0
    %v373 = vadd.f32 %v216, %v372
    %v374 = vpop.f32.mrb[0].mxu0
    %v375 = vpop.f32.mrb[0].mxu0
    %v376 = vadd.f32 %v216, %v375
    %v377 = vpop.f32.mrb[0].mxu0
    %378 = vmatprep.mubr.bf16.mxu0 %v156
    %379 = vmatmul.mubr.bf16.gmra.mrb[0].mxu0 %v155
    %v380 = vpop.f32.mrb[0].mxu0
    %v381 = vadd.f32 %v216, %v380
    %v382 = vpop.f32.mrb[0].mxu0
    %v383 = vpop.f32.mrb[0].mxu0
    %v384 = vadd.f32 %v216, %v383
    %v385 = vpop.f32.mrb[0].mxu0
    %386 = vmatprep.mubr.bf16.mxu0 %v158
    %387 = vmatmul.mubr.bf16.gmra.mrb[0].mxu0 %v157
    %v388 = vpop.f32.mrb[0].mxu0
    %v389 = vadd.f32 %v216, %v388
    %v390 = vpop.f32.mrb[0].mxu0
    %v391 = vpop.f32.mrb[0].mxu0
    %v392 = vadd.f32 %v216, %v391
    %v393 = vpop.f32.mrb[0].mxu0
    %394 = vmatprep.mubr.bf16.mxu0 %v160
    %395 = vmatmul.mubr.bf16.gmra.mrb[0].mxu0 %v159
    %v396 = vpop.f32.mrb[0].mxu0
    %v397 = vadd.f32 %v216, %v396
    %v398 = vpop.f32.mrb[0].mxu0
    %v399 = vpop.f32.mrb[0].mxu0
    %v400 = vadd.f32 %v216, %v399
    %v401 = vpop.f32.mrb[0].mxu0
    %402 = vmatprep.mubr.bf16.mxu0 %v162
    %403 = vmatmul.mubr.bf16.gmra.mrb[0].mxu0 %v161
    %v404 = vpop.f32.mrb[0].mxu0
    %v405 = vadd.f32 %v216, %v404
    %v406 = vpop.f32.mrb[0].mxu0
    %v407 = vpop.f32.mrb[0].mxu0
    %v408 = vadd.f32 %v216, %v407
    %v409 = vpop.f32.mrb[0].mxu0
    %410 = vmatprep.mubr.bf16.mxu0 %v164
    %411 = vmatmul.mubr.bf16.gmra.mrb[0].mxu0 %v163
    %v412 = vpop.f32.mrb[0].mxu0
    %v413 = vadd.f32 %v216, %v412
    %v414 = vpop.f32.mrb[0].mxu0
    %v415 = vpop.f32.mrb[0].mxu0
    %v416 = vadd.f32 %v216, %v415
    %v417 = vpop.f32.mrb[0].mxu0
    %418 = vmatprep.mubr.bf16.mxu0 %v166
    %419 = vmatmul.mubr.bf16.gmra.mrb[0].mxu0 %v165
    %v420 = vpop.f32.mrb[0].mxu0
    %v421 = vadd.f32 %v216, %v420
    %v422 = vpop.f32.mrb[0].mxu0
    %v423 = vpop.f32.mrb[0].mxu0
    %v424 = vadd.f32 %v216, %v423
    %v425 = vpop.f32.mrb[0].mxu0
    %426 = vmatprep.mubr.bf16.mxu0 %v168
    %427 = vmatmul.mubr.bf16.gmra.mrb[0].mxu0 %v167
    %v428 = vpop.f32.mrb[0].mxu0
    %v429 = vadd.f32 %v216, %v428
    %v430 = vpop.f32.mrb[0].mxu0
    %v431 = vpop.f32.mrb[0].mxu0
    %v432 = vadd.f32 %v216, %v431
    %v433 = vpop.f32.mrb[0].mxu0
    %434 = vmatprep.mubr.bf16.mxu0 %v170
    %435 = vmatmul.mubr.bf16.gmra.mrb[0].mxu0 %v169
    %v436 = vpop.f32.mrb[0].mxu0
    %v437 = vadd.f32 %v216, %v436
    %v438 = vpop.f32.mrb[0].mxu0
    %v439 = vpop.f32.mrb[0].mxu0
    %v440 = vadd.f32 %v216, %v439
    %v441 = vpop.f32.mrb[0].mxu0
    %442 = vmatprep.mubr.bf16.mxu0 %v172
    %443 = vmatmul.mubr.bf16.gmra.mrb[0].mxu0 %v171
    %v444 = vpop.f32.mrb[0].mxu0
    %v445 = vadd.f32 %v216, %v444
    %v446 = vpop.f32.mrb[0].mxu0
    %v447 = vpop.f32.mrb[0].mxu0
    %v448 = vadd.f32 %v216, %v447
    %v449 = vpop.f32.mrb[0].mxu0
    %450 = vmatprep.mubr.bf16.mxu0 %v174
    %451 = vmatmul.mubr.bf16.gmra.mrb[0].mxu0 %v173
    %v452 = vpop.f32.mrb[0].mxu0
    %v453 = vadd.f32 %v216, %v452
    %v454 = vpop.f32.mrb[0].mxu0
    %v455 = vpop.f32.mrb[0].mxu0
    %v456 = vadd.f32 %v216, %v455
    %v457 = vpop.f32.mrb[0].mxu0
    %458 = vmatprep.mubr.bf16.mxu0 %v176
    %459 = vmatmul.mubr.bf16.gmra.mrb[0].mxu0 %v175
    %v460 = vpop.f32.mrb[0].mxu0
    %v461 = vadd.f32 %v216, %v460
    %v462 = vpop.f32.mrb[0].mxu0
    %v463 = vpop.f32.mrb[0].mxu0
    %v464 = vadd.f32 %v216, %v463
    %v465 = vpop.f32.mrb[0].mxu0
    %466 = vmatprep.mubr.bf16.mxu0 %v178
    %467 = vmatmul.mubr.bf16.gmra.mrb[0].mxu0 %v177
    %v468 = vpop.f32.mrb[0].mxu0
    %v469 = vadd.f32 %v216, %v468
    %v470 = vpop.f32.mrb[0].mxu0
    %v471 = vpop.f32.mrb[0].mxu0
    %v472 = vadd.f32 %v216, %v471
    %v473 = vpop.f32.mrb[0].mxu0
    %474 = vdwg.mxu0
    %v475 = vmul.f32 %v349, 0.01
    %v476 = vmul.f32 %v352, 0.01
    %v477 = vmul.f32 %v357, 0.01
    %v478 = vmul.f32 %v360, 0.01
    %v479 = vmul.f32 %v365, 0.01
    %v480 = vmul.f32 %v368, 0.01
    %v481 = vmul.f32 %v373, 0.01
    %v482 = vmul.f32 %v376, 0.01
    %v483 = vmul.f32 %v381, 0.01
    %v484 = vmul.f32 %v384, 0.01
    %v485 = vmul.f32 %v389, 0.01
    %v486 = vmul.f32 %v392, 0.01
    %v487 = vmul.f32 %v397, 0.01
    %v488 = vmul.f32 %v400, 0.01
    %v489 = vmul.f32 %v405, 0.01
    %v490 = vmul.f32 %v408, 0.01
    %v491 = vmul.f32 %v413, 0.01
    %v492 = vmul.f32 %v416, 0.01
    %v493 = vmul.f32 %v421, 0.01
    %v494 = vmul.f32 %v424, 0.01
    %v495 = vmul.f32 %v429, 0.01
    %v496 = vmul.f32 %v432, 0.01
    %v497 = vmul.f32 %v437, 0.01
    %v498 = vmul.f32 %v440, 0.01
    %v499 = vmul.f32 %v445, 0.01
    %v500 = vmul.f32 %v448, 0.01
    %v501 = vmul.f32 %v453, 0.01
    %v502 = vmul.f32 %v456, 0.01
    %v503 = vmul.f32 %v461, 0.01
    %v504 = vmul.f32 %v464, 0.01
    %v505 = vmul.f32 %v469, 0.01
    %v506 = vmul.f32 %v472, 0.01
    %v507 = vmax.f32 %v349, %v475
    %v508 = vmax.f32 %v352, %v476
    %v509 = vmax.f32 %v357, %v477
    %v510 = vmax.f32 %v360, %v478
    %v511 = vmax.f32 %v365, %v479
    %v512 = vmax.f32 %v368, %v480
    %v513 = vmax.f32 %v373, %v481
    %v514 = vmax.f32 %v376, %v482
    %v515 = vmax.f32 %v381, %v483
    %v516 = vmax.f32 %v384, %v484
    %v517 = vmax.f32 %v389, %v485
    %v518 = vmax.f32 %v392, %v486
    %v519 = vmax.f32 %v397, %v487
    %v520 = vmax.f32 %v400, %v488
    %v521 = vmax.f32 %v405, %v489
    %v522 = vmax.f32 %v408, %v490
    %v523 = vmax.f32 %v413, %v491
    %v524 = vmax.f32 %v416, %v492
    %v525 = vmax.f32 %v421, %v493
    %v526 = vmax.f32 %v424, %v494
    %v527 = vmax.f32 %v429, %v495
    %v528 = vmax.f32 %v432, %v496
    %v529 = vmax.f32 %v437, %v497
    %v530 = vmax.f32 %v440, %v498
    %v531 = vmax.f32 %v445, %v499
    %v532 = vmax.f32 %v448, %v500
    %v533 = vmax.f32 %v453, %v501
    %v534 = vmax.f32 %v456, %v502
    %v535 = vmax.f32 %v461, %v503
    %v536 = vmax.f32 %v464, %v504
    %v537 = vmax.f32 %v469, %v505
    %v538 = vmax.f32 %v472, %v506
    %v539 = vpack.c.bf16 %v508, %v507
    %v540 = vpack.c.bf16 %v510, %v509
    %v541 = vpack.c.bf16 %v512, %v511
    %v542 = vpack.c.bf16 %v514, %v513
    %v543 = vpack.c.bf16 %v516, %v515
    %v544 = vpack.c.bf16 %v518, %v517
    %v545 = vpack.c.bf16 %v520, %v519
    %v546 = vpack.c.bf16 %v522, %v521
    %v547 = vpack.c.bf16 %v524, %v523
    %v548 = vpack.c.bf16 %v526, %v525
    %v549 = vpack.c.bf16 %v528, %v527
    %v550 = vpack.c.bf16 %v530, %v529
    %v551 = vpack.c.bf16 %v532, %v531
    %v552 = vpack.c.bf16 %v534, %v533
    %v553 = vpack.c.bf16 %v536, %v535
    %v554 = vpack.c.bf16 %v538, %v537
    %v555 = vld [vmem:[#allocation7] sm:$0xf]
    %v556 = vld [vmem:[#allocation7 + $0x4] sm:$0xf]
    %v557 = vld [vmem:[#allocation7 + $0x8] sm:$0xf]
    %v558 = vld [vmem:[#allocation7 + $0xc] sm:$0xf]
    %v559 = vld [vmem:[#allocation7 + $0x10] sm:$0xf]
    %v560 = vld [vmem:[#allocation7 + $0x14] sm:$0xf]
    %v561 = vld [vmem:[#allocation7 + $0x18] sm:$0xf]
    %v562 = vld [vmem:[#allocation7 + $0x1c] sm:$0xf]
    %v563 = vld [vmem:[#allocation7 + $0x20] sm:$0xf]
    %v564 = vld [vmem:[#allocation7 + $0x24] sm:$0xf]
    %v565 = vld [vmem:[#allocation7 + $0x28] sm:$0xf]
    %v566 = vld [vmem:[#allocation7 + $0x2c] sm:$0xf]
    %v567 = vld [vmem:[#allocation7 + $0x30] sm:$0xf]
    %v568 = vld [vmem:[#allocation7 + $0x34] sm:$0xf]
    %v569 = vld [vmem:[#allocation7 + $0x38] sm:$0xf]
    %v570 = vld [vmem:[#allocation7 + $0x3c] sm:$0xf]
    %v571 = vld [vmem:[%s4] sm:$0x1]
    %v573 = vlaneseq
    %v574 = vshrl.u32 %v573, 7
    %v575 = vsub.s32 0, %v574
    %v576 = vrot.slane %v571, %v575
    %v594 = vunpack.c.l.b16 %v555
    %v595 = vunpack.c.l.b16 %v556
    %v596 = vunpack.c.l.b16 %v557
    %v597 = vunpack.c.l.b16 %v558
    %v598 = vunpack.c.l.b16 %v559
    %v599 = vunpack.c.l.b16 %v560
    %v600 = vunpack.c.l.b16 %v561
    %v601 = vunpack.c.l.b16 %v562
    %v602 = vunpack.c.l.b16 %v563
    %v603 = vunpack.c.l.b16 %v564
    %v604 = vunpack.c.l.b16 %v565
    %v605 = vunpack.c.l.b16 %v566
    %v606 = vunpack.c.l.b16 %v567
    %v607 = vunpack.c.l.b16 %v568
    %v608 = vunpack.c.l.b16 %v569
    %v609 = vunpack.c.l.b16 %v570
    %v610 = vpack.c.b16 %v595, %v594
    %v611 = vpack.c.b16 %v597, %v596
    %v612 = vpack.c.b16 %v599, %v598
    %v613 = vpack.c.b16 %v601, %v600
    %v614 = vpack.c.b16 %v603, %v602
    %v615 = vpack.c.b16 %v605, %v604
    %v616 = vpack.c.b16 %v607, %v606
    %v617 = vpack.c.b16 %v609, %v608
    %626 = vmatprep.subr.bf16.mxu0 0
    %627 = vmatpush1.bf16.msra.mxu0 %v610
    %628 = vmatprep.subr.bf16.mxu0 0
    %629 = vmatpush1.bf16.msra.mxu0 %v611
    %630 = vmatprep.subr.bf16.mxu0 0
    %631 = vmatpush1.bf16.msra.mxu0 %v612
    %632 = vmatprep.subr.bf16.mxu0 0
    %633 = vmatpush1.bf16.msra.mxu0 %v613
    %634 = vmatprep.subr.bf16.mxu0 0
    %635 = vmatpush1.bf16.msra.mxu0 %v614
    %636 = vmatprep.subr.bf16.mxu0 0
    %637 = vmatpush1.bf16.msra.mxu0 %v615
    %638 = vmatprep.subr.bf16.mxu0 0
    %639 = vmatpush1.bf16.msra.mxu0 %v616
    %640 = vmatprep.subr.bf16.mxu0 0
    %641 = vmatpush1.bf16.msra.mxu0 %v617
    %642 = vmatprep.subr.bf16.mxu0 0
    %643 = vmatpush1.bf16.msra.mxu0 0
    %644 = vmatprep.subr.bf16.mxu0 0
    %645 = vmatpush1.bf16.msra.mxu0 0
    %646 = vmatprep.subr.bf16.mxu0 0
    %647 = vmatpush1.bf16.msra.mxu0 0
    %648 = vmatprep.subr.bf16.mxu0 0
    %649 = vmatpush1.bf16.msra.mxu0 0
    %650 = vmatprep.subr.bf16.mxu0 0
    %651 = vmatpush1.bf16.msra.mxu0 0
    %652 = vmatprep.subr.bf16.mxu0 0
    %653 = vmatpush1.bf16.msra.mxu0 0
    %654 = vmatprep.subr.bf16.mxu0 0
    %655 = vmatpush1.bf16.msra.mxu0 0
    %656 = vmatprep.subr.bf16.mxu0 0
    %657 = vmatpush1.bf16.msra.mxu0 0
    %658 = vmatprep.mubr.bf16.mxu0 0
    %659 = vmatmul.mubr.bf16.gmra.mrb[0].mxu0 %v539
    %v660 = vpop.f32.mrb[0].mxu0
    %v661 = vadd.f32 %v576, %v660
    %v662 = vpop.f32.mrb[0].mxu0
    %v663 = vpop.f32.mrb[0].mxu0
    %v664 = vadd.f32 %v576, %v663
    %v665 = vpop.f32.mrb[0].mxu0
    %666 = vmatprep.mubr.bf16.mxu0 0
    %667 = vmatmul.mubr.bf16.gmra.mrb[0].mxu0 %v540
    %v668 = vpop.f32.mrb[0].mxu0
    %v669 = vadd.f32 %v576, %v668
    %v670 = vpop.f32.mrb[0].mxu0
    %v671 = vpop.f32.mrb[0].mxu0
    %v672 = vadd.f32 %v576, %v671
    %v673 = vpop.f32.mrb[0].mxu0
    %674 = vmatprep.mubr.bf16.mxu0 0
    %675 = vmatmul.mubr.bf16.gmra.mrb[0].mxu0 %v541
    %v676 = vpop.f32.mrb[0].mxu0
    %v677 = vadd.f32 %v576, %v676
    %v678 = vpop.f32.mrb[0].mxu0
    %v679 = vpop.f32.mrb[0].mxu0
    %v680 = vadd.f32 %v576, %v679
    %v681 = vpop.f32.mrb[0].mxu0
    %682 = vmatprep.mubr.bf16.mxu0 0
    %683 = vmatmul.mubr.bf16.gmra.mrb[0].mxu0 %v542
    %v684 = vpop.f32.mrb[0].mxu0
    %v685 = vadd.f32 %v576, %v684
    %v686 = vpop.f32.mrb[0].mxu0
    %v687 = vpop.f32.mrb[0].mxu0
    %v688 = vadd.f32 %v576, %v687
    %v689 = vpop.f32.mrb[0].mxu0
    %690 = vmatprep.mubr.bf16.mxu0 0
    %691 = vmatmul.mubr.bf16.gmra.mrb[0].mxu0 %v543
    %v692 = vpop.f32.mrb[0].mxu0
    %v693 = vadd.f32 %v576, %v692
    %v694 = vpop.f32.mrb[0].mxu0
    %v695 = vpop.f32.mrb[0].mxu0
    %v696 = vadd.f32 %v576, %v695
    %v697 = vpop.f32.mrb[0].mxu0
    %698 = vmatprep.mubr.bf16.mxu0 0
    %699 = vmatmul.mubr.bf16.gmra.mrb[0].mxu0 %v544
    %v700 = vpop.f32.mrb[0].mxu0
    %v701 = vadd.f32 %v576, %v700
    %v702 = vpop.f32.mrb[0].mxu0
    %v703 = vpop.f32.mrb[0].mxu0
    %v704 = vadd.f32 %v576, %v703
    %v705 = vpop.f32.mrb[0].mxu0
    %706 = vmatprep.mubr.bf16.mxu0 0
    %707 = vmatmul.mubr.bf16.gmra.mrb[0].mxu0 %v545
    %v708 = vpop.f32.mrb[0].mxu0
    %v709 = vadd.f32 %v576, %v708
    %v710 = vpop.f32.mrb[0].mxu0
    %v711 = vpop.f32.mrb[0].mxu0
    %v712 = vadd.f32 %v576, %v711
    %v713 = vpop.f32.mrb[0].mxu0
    %714 = vmatprep.mubr.bf16.mxu0 0
    %715 = vmatmul.mubr.bf16.gmra.mrb[0].mxu0 %v546
    %v716 = vpop.f32.mrb[0].mxu0
    %v717 = vadd.f32 %v576, %v716
    %v718 = vpop.f32.mrb[0].mxu0
    %v719 = vpop.f32.mrb[0].mxu0
    %v720 = vadd.f32 %v576, %v719
    %v721 = vpop.f32.mrb[0].mxu0
    %722 = vmatprep.mubr.bf16.mxu0 0
    %723 = vmatmul.mubr.bf16.gmra.mrb[0].mxu0 %v547
    %v724 = vpop.f32.mrb[0].mxu0
    %v725 = vadd.f32 %v576, %v724
    %v726 = vpop.f32.mrb[0].mxu0
    %v727 = vpop.f32.mrb[0].mxu0
    %v728 = vadd.f32 %v576, %v727
    %v729 = vpop.f32.mrb[0].mxu0
    %730 = vmatprep.mubr.bf16.mxu0 0
    %731 = vmatmul.mubr.bf16.gmra.mrb[0].mxu0 %v548
    %v732 = vpop.f32.mrb[0].mxu0
    %v733 = vadd.f32 %v576, %v732
    %v734 = vpop.f32.mrb[0].mxu0
    %v735 = vpop.f32.mrb[0].mxu0
    %v736 = vadd.f32 %v576, %v735
    %v737 = vpop.f32.mrb[0].mxu0
    %738 = vmatprep.mubr.bf16.mxu0 0
    %739 = vmatmul.mubr.bf16.gmra.mrb[0].mxu0 %v549
    %v740 = vpop.f32.mrb[0].mxu0
    %v741 = vadd.f32 %v576, %v740
    %v742 = vpop.f32.mrb[0].mxu0
    %v743 = vpop.f32.mrb[0].mxu0
    %v744 = vadd.f32 %v576, %v743
    %v745 = vpop.f32.mrb[0].mxu0
    %746 = vmatprep.mubr.bf16.mxu0 0
    %747 = vmatmul.mubr.bf16.gmra.mrb[0].mxu0 %v550
    %v748 = vpop.f32.mrb[0].mxu0
    %v749 = vadd.f32 %v576, %v748
    %v750 = vpop.f32.mrb[0].mxu0
    %v751 = vpop.f32.mrb[0].mxu0
    %v752 = vadd.f32 %v576, %v751
    %v753 = vpop.f32.mrb[0].mxu0
    %754 = vmatprep.mubr.bf16.mxu0 0
    %755 = vmatmul.mubr.bf16.gmra.mrb[0].mxu0 %v551
    %v756 = vpop.f32.mrb[0].mxu0
    %v757 = vadd.f32 %v576, %v756
    %v758 = vpop.f32.mrb[0].mxu0
    %v759 = vpop.f32.mrb[0].mxu0
    %v760 = vadd.f32 %v576, %v759
    %v761 = vpop.f32.mrb[0].mxu0
    %762 = vmatprep.mubr.bf16.mxu0 0
    %763 = vmatmul.mubr.bf16.gmra.mrb[0].mxu0 %v552
    %v764 = vpop.f32.mrb[0].mxu0
    %v765 = vadd.f32 %v576, %v764
    %v766 = vpop.f32.mrb[0].mxu0
    %v767 = vpop.f32.mrb[0].mxu0
    %v768 = vadd.f32 %v576, %v767
    %v769 = vpop.f32.mrb[0].mxu0
    %770 = vmatprep.mubr.bf16.mxu0 0
    %771 = vmatmul.mubr.bf16.gmra.mrb[0].mxu0 %v553
    %v772 = vpop.f32.mrb[0].mxu0
    %v773 = vadd.f32 %v576, %v772
    %v774 = vpop.f32.mrb[0].mxu0
    %v775 = vpop.f32.mrb[0].mxu0
    %v776 = vadd.f32 %v576, %v775
    %v777 = vpop.f32.mrb[0].mxu0
    %778 = vmatprep.mubr.bf16.mxu0 0
    %779 = vmatmul.mubr.bf16.gmra.mrb[0].mxu0 %v554
    %v780 = vpop.f32.mrb[0].mxu0
    %v781 = vadd.f32 %v576, %v780
    %v782 = vpop.f32.mrb[0].mxu0
    %v783 = vpop.f32.mrb[0].mxu0
    %v784 = vadd.f32 %v576, %v783
    %v785 = vpop.f32.mrb[0].mxu0
    %786 = vdwg.mxu0
    %v787 = vmul.f32 %v661, 0.01
    %v788 = vmul.f32 %v664, 0.01
    %v789 = vmul.f32 %v669, 0.01
    %v790 = vmul.f32 %v672, 0.01
    %v791 = vmul.f32 %v677, 0.01
    %v792 = vmul.f32 %v680, 0.01
    %v793 = vmul.f32 %v685, 0.01
    %v794 = vmul.f32 %v688, 0.01
    %v795 = vmul.f32 %v693, 0.01
    %v796 = vmul.f32 %v696, 0.01
    %v797 = vmul.f32 %v701, 0.01
    %v798 = vmul.f32 %v704, 0.01
    %v799 = vmul.f32 %v709, 0.01
    %v800 = vmul.f32 %v712, 0.01
    %v801 = vmul.f32 %v717, 0.01
    %v802 = vmul.f32 %v720, 0.01
    %v803 = vmul.f32 %v725, 0.01
    %v804 = vmul.f32 %v728, 0.01
    %v805 = vmul.f32 %v733, 0.01
    %v806 = vmul.f32 %v736, 0.01
    %v807 = vmul.f32 %v741, 0.01
    %v808 = vmul.f32 %v744, 0.01
    %v809 = vmul.f32 %v749, 0.01
    %v810 = vmul.f32 %v752, 0.01
    %v811 = vmul.f32 %v757, 0.01
    %v812 = vmul.f32 %v760, 0.01
    %v813 = vmul.f32 %v765, 0.01
    %v814 = vmul.f32 %v768, 0.01
    %v815 = vmul.f32 %v773, 0.01
    %v816 = vmul.f32 %v776, 0.01
    %v817 = vmul.f32 %v781, 0.01
    %v818 = vmul.f32 %v784, 0.01
    %v819 = vmax.f32 %v661, %v787
    %v820 = vmax.f32 %v664, %v788
    %v821 = vmax.f32 %v669, %v789
    %v822 = vmax.f32 %v672, %v790
    %v823 = vmax.f32 %v677, %v791
    %v824 = vmax.f32 %v680, %v792
    %v825 = vmax.f32 %v685, %v793
    %v826 = vmax.f32 %v688, %v794
    %v827 = vmax.f32 %v693, %v795
    %v828 = vmax.f32 %v696, %v796
    %v829 = vmax.f32 %v701, %v797
    %v830 = vmax.f32 %v704, %v798
    %v831 = vmax.f32 %v709, %v799
    %v832 = vmax.f32 %v712, %v800
    %v833 = vmax.f32 %v717, %v801
    %v834 = vmax.f32 %v720, %v802
    %v835 = vmax.f32 %v725, %v803
    %v836 = vmax.f32 %v728, %v804
    %v837 = vmax.f32 %v733, %v805
    %v838 = vmax.f32 %v736, %v806
    %v839 = vmax.f32 %v741, %v807
    %v840 = vmax.f32 %v744, %v808
    %v841 = vmax.f32 %v749, %v809
    %v842 = vmax.f32 %v752, %v810
    %v843 = vmax.f32 %v757, %v811
    %v844 = vmax.f32 %v760, %v812
    %v845 = vmax.f32 %v765, %v813
    %v846 = vmax.f32 %v768, %v814
    %v847 = vmax.f32 %v773, %v815
    %v848 = vmax.f32 %v776, %v816
    %v849 = vmax.f32 %v781, %v817
    %v850 = vmax.f32 %v784, %v818
    %v851 = vpack.c.bf16 %v820, %v819
    %v852 = vpack.c.bf16 %v822, %v821
    %v853 = vpack.c.bf16 %v824, %v823
    %v854 = vpack.c.bf16 %v826, %v825
    %v855 = vpack.c.bf16 %v828, %v827
    %v856 = vpack.c.bf16 %v830, %v829
    %v857 = vpack.c.bf16 %v832, %v831
    %v858 = vpack.c.bf16 %v834, %v833
    %v859 = vpack.c.bf16 %v836, %v835
    %v860 = vpack.c.bf16 %v838, %v837
    %v861 = vpack.c.bf16 %v840, %v839
    %v862 = vpack.c.bf16 %v842, %v841
    %v863 = vpack.c.bf16 %v844, %v843
    %v864 = vpack.c.bf16 %v846, %v845
    %v865 = vpack.c.bf16 %v848, %v847
    %v866 = vpack.c.bf16 %v850, %v849
    %v867 = vld [vmem:[#allocation8] sm:$0xf]
    %v868 = vld [vmem:[#allocation8 + $0x4] sm:$0xf]
    %v869 = vld [vmem:[#allocation8 + $0x8] sm:$0xf]
    %v870 = vld [vmem:[#allocation8 + $0xc] sm:$0xf]
    %v871 = vld [vmem:[#allocation8 + $0x10] sm:$0xf]
    %v872 = vld [vmem:[#allocation8 + $0x14] sm:$0xf]
    %v873 = vld [vmem:[#allocation8 + $0x18] sm:$0xf]
    %v874 = vld [vmem:[#allocation8 + $0x1c] sm:$0xf]
    %v875 = vld [vmem:[#allocation8 + $0x20] sm:$0xf]
    %v876 = vld [vmem:[#allocation8 + $0x24] sm:$0xf]
    %v877 = vld [vmem:[#allocation8 + $0x28] sm:$0xf]
    %v878 = vld [vmem:[#allocation8 + $0x2c] sm:$0xf]
    %v879 = vld [vmem:[#allocation8 + $0x30] sm:$0xf]
    %v880 = vld [vmem:[#allocation8 + $0x34] sm:$0xf]
    %v881 = vld [vmem:[#allocation8 + $0x38] sm:$0xf]
    %v882 = vld [vmem:[#allocation8 + $0x3c] sm:$0xf]
    %v883 = vld [vmem:[%s6] sm:$0x1]
    %v885 = vlaneseq
    %v886 = vshrl.u32 %v885, 7
    %v887 = vsub.s32 0, %v886
    %v888 = vrot.slane %v883, %v887
    %v906 = vunpack.c.l.b16 %v867
    %v907 = vunpack.c.l.b16 %v868
    %v908 = vunpack.c.l.b16 %v869
    %v909 = vunpack.c.l.b16 %v870
    %v910 = vunpack.c.l.b16 %v871
    %v911 = vunpack.c.l.b16 %v872
    %v912 = vunpack.c.l.b16 %v873
    %v913 = vunpack.c.l.b16 %v874
    %v914 = vunpack.c.l.b16 %v875
    %v915 = vunpack.c.l.b16 %v876
    %v916 = vunpack.c.l.b16 %v877
    %v917 = vunpack.c.l.b16 %v878
    %v918 = vunpack.c.l.b16 %v879
    %v919 = vunpack.c.l.b16 %v880
    %v920 = vunpack.c.l.b16 %v881
    %v921 = vunpack.c.l.b16 %v882
    %v922 = vpack.c.b16 %v907, %v906
    %v923 = vpack.c.b16 %v909, %v908
    %v924 = vpack.c.b16 %v911, %v910
    %v925 = vpack.c.b16 %v913, %v912
    %v926 = vpack.c.b16 %v915, %v914
    %v927 = vpack.c.b16 %v917, %v916
    %v928 = vpack.c.b16 %v919, %v918
    %v929 = vpack.c.b16 %v921, %v920
    %938 = vmatprep.subr.bf16.mxu0 0
    %939 = vmatpush1.bf16.msra.mxu0 %v922
    %940 = vmatprep.subr.bf16.mxu0 0
    %941 = vmatpush1.bf16.msra.mxu0 %v923
    %942 = vmatprep.subr.bf16.mxu0 0
    %943 = vmatpush1.bf16.msra.mxu0 %v924
    %944 = vmatprep.subr.bf16.mxu0 0
    %945 = vmatpush1.bf16.msra.mxu0 %v925
    %946 = vmatprep.subr.bf16.mxu0 0
    %947 = vmatpush1.bf16.msra.mxu0 %v926
    %948 = vmatprep.subr.bf16.mxu0 0
    %949 = vmatpush1.bf16.msra.mxu0 %v927
    %950 = vmatprep.subr.bf16.mxu0 0
    %951 = vmatpush1.bf16.msra.mxu0 %v928
    %952 = vmatprep.subr.bf16.mxu0 0
    %953 = vmatpush1.bf16.msra.mxu0 %v929
    %954 = vmatprep.subr.bf16.mxu0 0
    %955 = vmatpush1.bf16.msra.mxu0 0
    %956 = vmatprep.subr.bf16.mxu0 0
    %957 = vmatpush1.bf16.msra.mxu0 0
    %958 = vmatprep.subr.bf16.mxu0 0
    %959 = vmatpush1.bf16.msra.mxu0 0
    %960 = vmatprep.subr.bf16.mxu0 0
    %961 = vmatpush1.bf16.msra.mxu0 0
    %962 = vmatprep.subr.bf16.mxu0 0
    %963 = vmatpush1.bf16.msra.mxu0 0
    %964 = vmatprep.subr.bf16.mxu0 0
    %965 = vmatpush1.bf16.msra.mxu0 0
    %966 = vmatprep.subr.bf16.mxu0 0
    %967 = vmatpush1.bf16.msra.mxu0 0
    %968 = vmatprep.subr.bf16.mxu0 0
    %969 = vmatpush1.bf16.msra.mxu0 0
    %970 = vmatprep.mubr.bf16.mxu0 0
    %971 = vmatmul.mubr.bf16.gmra.mrb[0].mxu0 %v851
    %v972 = vpop.f32.mrb[0].mxu0
    %v973 = vadd.f32 %v888, %v972
    %v974 = vpop.f32.mrb[0].mxu0
    %v975 = vpop.f32.mrb[0].mxu0
    %v976 = vadd.f32 %v888, %v975
    %v977 = vpop.f32.mrb[0].mxu0
    %978 = vmatprep.mubr.bf16.mxu0 0
    %979 = vmatmul.mubr.bf16.gmra.mrb[0].mxu0 %v852
    %v980 = vpop.f32.mrb[0].mxu0
    %v981 = vadd.f32 %v888, %v980
    %v982 = vpop.f32.mrb[0].mxu0
    %v983 = vpop.f32.mrb[0].mxu0
    %v984 = vadd.f32 %v888, %v983
    %v985 = vpop.f32.mrb[0].mxu0
    %986 = vmatprep.mubr.bf16.mxu0 0
    %987 = vmatmul.mubr.bf16.gmra.mrb[0].mxu0 %v853
    %v988 = vpop.f32.mrb[0].mxu0
    %v989 = vadd.f32 %v888, %v988
    %v990 = vpop.f32.mrb[0].mxu0
    %v991 = vpop.f32.mrb[0].mxu0
    %v992 = vadd.f32 %v888, %v991
    %v993 = vpop.f32.mrb[0].mxu0
    %994 = vmatprep.mubr.bf16.mxu0 0
    %995 = vmatmul.mubr.bf16.gmra.mrb[0].mxu0 %v854
    %v996 = vpop.f32.mrb[0].mxu0
    %v997 = vadd.f32 %v888, %v996
    %v998 = vpop.f32.mrb[0].mxu0
    %v999 = vpop.f32.mrb[0].mxu0
    %v1000 = vadd.f32 %v888, %v999
    %v1001 = vpop.f32.mrb[0].mxu0
    %1002 = vmatprep.mubr.bf16.mxu0 0
    %1003 = vmatmul.mubr.bf16.gmra.mrb[0].mxu0 %v855
    %v1004 = vpop.f32.mrb[0].mxu0
    %v1005 = vadd.f32 %v888, %v1004
    %v1006 = vpop.f32.mrb[0].mxu0
    %v1007 = vpop.f32.mrb[0].mxu0
    %v1008 = vadd.f32 %v888, %v1007
    %v1009 = vpop.f32.mrb[0].mxu0
    %1010 = vmatprep.mubr.bf16.mxu0 0
    %1011 = vmatmul.mubr.bf16.gmra.mrb[0].mxu0 %v856
    %v1012 = vpop.f32.mrb[0].mxu0
    %v1013 = vadd.f32 %v888, %v1012
    %v1014 = vpop.f32.mrb[0].mxu0
    %v1015 = vpop.f32.mrb[0].mxu0
    %v1016 = vadd.f32 %v888, %v1015
    %v1017 = vpop.f32.mrb[0].mxu0
    %1018 = vmatprep.mubr.bf16.mxu0 0
    %1019 = vmatmul.mubr.bf16.gmra.mrb[0].mxu0 %v857
    %v1020 = vpop.f32.mrb[0].mxu0
    %v1021 = vadd.f32 %v888, %v1020
    %v1022 = vpop.f32.mrb[0].mxu0
    %v1023 = vpop.f32.mrb[0].mxu0
    %v1024 = vadd.f32 %v888, %v1023
    %v1025 = vpop.f32.mrb[0].mxu0
    %1026 = vmatprep.mubr.bf16.mxu0 0
    %1027 = vmatmul.mubr.bf16.gmra.mrb[0].mxu0 %v858
    %v1028 = vpop.f32.mrb[0].mxu0
    %v1029 = vadd.f32 %v888, %v1028
    %v1030 = vpop.f32.mrb[0].mxu0
    %v1031 = vpop.f32.mrb[0].mxu0
    %v1032 = vadd.f32 %v888, %v1031
    %v1033 = vpop.f32.mrb[0].mxu0
    %1034 = vmatprep.mubr.bf16.mxu0 0
    %1035 = vmatmul.mubr.bf16.gmra.mrb[0].mxu0 %v859
    %v1036 = vpop.f32.mrb[0].mxu0
    %v1037 = vadd.f32 %v888, %v1036
    %v1038 = vpop.f32.mrb[0].mxu0
    %v1039 = vpop.f32.mrb[0].mxu0
    %v1040 = vadd.f32 %v888, %v1039
    %v1041 = vpop.f32.mrb[0].mxu0
    %1042 = vmatprep.mubr.bf16.mxu0 0
    %1043 = vmatmul.mubr.bf16.gmra.mrb[0].mxu0 %v860
    %v1044 = vpop.f32.mrb[0].mxu0
    %v1045 = vadd.f32 %v888, %v1044
    %v1046 = vpop.f32.mrb[0].mxu0
    %v1047 = vpop.f32.mrb[0].mxu0
    %v1048 = vadd.f32 %v888, %v1047
    %v1049 = vpop.f32.mrb[0].mxu0
    %1050 = vmatprep.mubr.bf16.mxu0 0
    %1051 = vmatmul.mubr.bf16.gmra.mrb[0].mxu0 %v861
    %v1052 = vpop.f32.mrb[0].mxu0
    %v1053 = vadd.f32 %v888, %v1052
    %v1054 = vpop.f32.mrb[0].mxu0
    %v1055 = vpop.f32.mrb[0].mxu0
    %v1056 = vadd.f32 %v888, %v1055
    %v1057 = vpop.f32.mrb[0].mxu0
    %1058 = vmatprep.mubr.bf16.mxu0 0
    %1059 = vmatmul.mubr.bf16.gmra.mrb[0].mxu0 %v862
    %v1060 = vpop.f32.mrb[0].mxu0
    %v1061 = vadd.f32 %v888, %v1060
    %v1062 = vpop.f32.mrb[0].mxu0
    %v1063 = vpop.f32.mrb[0].mxu0
    %v1064 = vadd.f32 %v888, %v1063
    %v1065 = vpop.f32.mrb[0].mxu0
    %1066 = vmatprep.mubr.bf16.mxu0 0
    %1067 = vmatmul.mubr.bf16.gmra.mrb[0].mxu0 %v863
    %v1068 = vpop.f32.mrb[0].mxu0
    %v1069 = vadd.f32 %v888, %v1068
    %v1070 = vpop.f32.mrb[0].mxu0
    %v1071 = vpop.f32.mrb[0].mxu0
    %v1072 = vadd.f32 %v888, %v1071
    %v1073 = vpop.f32.mrb[0].mxu0
    %1074 = vmatprep.mubr.bf16.mxu0 0
    %1075 = vmatmul.mubr.bf16.gmra.mrb[0].mxu0 %v864
    %v1076 = vpop.f32.mrb[0].mxu0
    %v1077 = vadd.f32 %v888, %v1076
    %v1078 = vpop.f32.mrb[0].mxu0
    %v1079 = vpop.f32.mrb[0].mxu0
    %v1080 = vadd.f32 %v888, %v1079
    %v1081 = vpop.f32.mrb[0].mxu0
    %1082 = vmatprep.mubr.bf16.mxu0 0
    %1083 = vmatmul.mubr.bf16.gmra.mrb[0].mxu0 %v865
    %v1084 = vpop.f32.mrb[0].mxu0
    %v1085 = vadd.f32 %v888, %v1084
    %v1086 = vpop.f32.mrb[0].mxu0
    %v1087 = vpop.f32.mrb[0].mxu0
    %v1088 = vadd.f32 %v888, %v1087
    %v1089 = vpop.f32.mrb[0].mxu0
    %1090 = vmatprep.mubr.bf16.mxu0 0
    %1091 = vmatmul.mubr.bf16.gmra.mrb[0].mxu0 %v866
    %v1092 = vpop.f32.mrb[0].mxu0
    %v1093 = vadd.f32 %v888, %v1092
    %v1094 = vpop.f32.mrb[0].mxu0
    %v1095 = vpop.f32.mrb[0].mxu0
    %v1096 = vadd.f32 %v888, %v1095
    %v1097 = vpop.f32.mrb[0].mxu0
    %1098 = vdwg.mxu0
    %1099 = vst [vmem:[#allocation10] sm:$0xff] %v973
    %1100 = vst [vmem:[#allocation10 + $0x8] sm:$0xff] %v976
    %1101 = vst [vmem:[#allocation10 + $0x10] sm:$0xff] %v981
    %1102 = vst [vmem:[#allocation10 + $0x18] sm:$0xff] %v984
    %1103 = vst [vmem:[#allocation10 + $0x20] sm:$0xff] %v989
    %1104 = vst [vmem:[#allocation10 + $0x28] sm:$0xff] %v992
    %1105 = vst [vmem:[#allocation10 + $0x30] sm:$0xff] %v997
    %1106 = vst [vmem:[#allocation10 + $0x38] sm:$0xff] %v1000
    %1107 = vst [vmem:[#allocation10 + $0x40] sm:$0xff] %v1005
    %1108 = vst [vmem:[#allocation10 + $0x48] sm:$0xff] %v1008
    %1109 = vst [vmem:[#allocation10 + $0x50] sm:$0xff] %v1013
    %1110 = vst [vmem:[#allocation10 + $0x58] sm:$0xff] %v1016
    %1111 = vst [vmem:[#allocation10 + $0x60] sm:$0xff] %v1021
    %1112 = vst [vmem:[#allocation10 + $0x68] sm:$0xff] %v1024
    %1113 = vst [vmem:[#allocation10 + $0x70] sm:$0xff] %v1029
    %1114 = vst [vmem:[#allocation10 + $0x78] sm:$0xff] %v1032
    %1115 = vst [vmem:[#allocation10 + $0x80] sm:$0xff] %v1037
    %1116 = vst [vmem:[#allocation10 + $0x88] sm:$0xff] %v1040
    %1117 = vst [vmem:[#allocation10 + $0x90] sm:$0xff] %v1045
    %1118 = vst [vmem:[#allocation10 + $0x98] sm:$0xff] %v1048
    %1119 = vst [vmem:[#allocation10 + $0xa0] sm:$0xff] %v1053
    %1120 = vst [vmem:[#allocation10 + $0xa8] sm:$0xff] %v1056
    %1121 = vst [vmem:[#allocation10 + $0xb0] sm:$0xff] %v1061
    %1122 = vst [vmem:[#allocation10 + $0xb8] sm:$0xff] %v1064
    %1123 = vst [vmem:[#allocation10 + $0xc0] sm:$0xff] %v1069
    %1124 = vst [vmem:[#allocation10 + $0xc8] sm:$0xff] %v1072
    %1125 = vst [vmem:[#allocation10 + $0xd0] sm:$0xff] %v1077
    %1126 = vst [vmem:[#allocation10 + $0xd8] sm:$0xff] %v1080
    %1127 = vst [vmem:[#allocation10 + $0xe0] sm:$0xff] %v1085
    %1128 = vst [vmem:[#allocation10 + $0xe8] sm:$0xff] %v1088
    %1129 = vst [vmem:[#allocation10 + $0xf0] sm:$0xff] %v1093
    %1130 = vst [vmem:[#allocation10 + $0xf8] sm:$0xff] %v1096
    // Predicated region
    $region46: #{tpu_custom_call.1} parent=1 // pred_check
      _
    $region47: #{tpu_custom_call.1} parent=1 // pred_check_branch
      %1132 = sbr.rel (0) target = $region49
    $region48: #{tpu_custom_call.1} parent=1 // pred_region
      %s1134 = ssub.s32 4096, 4096
      %1135 = vsyncadd [#allocation4], %s1134
      %s1136 = sshll.u32 [#allocation10], 4
      %s1137 = int_to_ptr.vmem [resolvable:$true] %s1136
      %1142 = dma.vmem_to_hbm [thread:$0]  %s1137, 4096, %s7, [#allocation4], 128, 128, 8
    $region49: #{tpu_custom_call.1} parent=1 // pred_fallthru
      _
    // Predicated region
    $region50: #{tpu_custom_call.1} parent=1 // pred_check
      _
    $region51: #{tpu_custom_call.1} parent=1 // pred_check_branch
      %1144 = sbr.rel (0) target = $region53
    $region52: #{tpu_custom_call.1} parent=1 // pred_region
      %1145 = dma.done [#allocation4], 4096
    $region53: #{tpu_custom_call.1} parent=1 // pred_fallthru
      _
    %1146 = vsyncpa [#allocation3], 1
    %1147 = vsyncpa [#allocation6], 1
    %1148 = vsyncpa [#allocation9], 1
    %1149 = vsyncpa [#allocation4], 1

</llo_original>
